<compile_context>
chip_gen: v7x
topology: tpu7x:2x2x1
jax: 0.10.0
libtpu: 0.0.40
codegen_flags: <defaults>
</compile_context>

<pallas_src>
import functools

import numpy as np
import jax
import jax.numpy as jnp
from jax import lax
from jax.experimental import pallas as pl
from jax.experimental.pallas import tpu as pltpu

LANES = 128
ACC_SUBLANES = 8


def _cdiv(a, b):
    return -(-a // b)


def _round_up(a, m):
    return _cdiv(a, m) * m


def build_edge_indices(faces_np):
    """Replicates FlattenLoss.__init__ edge-adjacency construction (host-side numpy)."""
    faces = np.asarray(faces_np, np.int32)
    pairs = np.sort(np.concatenate((faces[:, 0:2], faces[:, 1:3]), axis=0))
    # sorted() for determinism; the mean in forward() is order-invariant anyway.
    edge_list = sorted(set(tuple(v) for v in pairs))
    v0s = np.array([v[0] for v in edge_list], np.int32)
    v1s = np.array([v[1] for v in edge_list], np.int32)
    v2s, v3s = [], []
    for v0, v1 in zip(v0s, v1s):
        bface = np.sum(faces == v0, axis=1) + np.sum(faces == v1, axis=1)
        fidxs = np.where(bface == 2)[0]
        f1 = faces[fidxs[0]]
        v2s.append(f1[(f1 != v1) * (f1 != v0)][0])
        f2 = faces[fidxs[1]]
        v3s.append(f2[(f2 != v1) * (f2 != v0)][0])
    return v0s, v1s, np.array(v2s, np.int32), np.array(v3s, np.int32)


def _flatten_loss_kernel(d_ref, out_ref, *, n_edges, tile_r, steps_per_core):
    # d_ref:   (9, tile_r, 128) — row = comp*3 + vec, vec in {c10, c20, c30}
    # out_ref: (8, 128) f32     — per-core partial sum of (1 - cos), vreg accumulator
    c = pl.program_id(0)            # TensorCore split ("parallel")
    i = pl.program_id(1)            # edge-tile step   ("arbitrary")

    @pl.when(i == 0)
    def _init():
        out_ref[...] = jnp.zeros_like(out_ref)

    def ch(comp, vec):
        return d_ref[comp * 3 + vec].astype(jnp.float32)   # (tile_r, 128) full tile

    c10x, c20x, c30x = ch(0, 0), ch(0, 1), ch(0, 2)
    c10y, c20y, c30y = ch(1, 0), ch(1, 1), ch(1, 2)
    c10z, c20z, c30z = ch(2, 0), ch(2, 1), ch(2, 2)

    # n0 = c10 x c20 ; m = c10 x c30 ; n1 = -m (negation folded into 1 - cos below)
    n0x = c10y * c20z - c10z * c20y
    n0y = c10z * c20x - c10x * c20z
    n0z = c10x * c20y - c10y * c20x
    mx = c10y * c30z - c10z * c30y
    my = c10z * c30x - c10x * c30z
    mz = c10x * c30y - c10y * c30x

    dot_nm = n0x * mx + n0y * my + n0z * mz          # = -dot(n0, n1)
    n0sq = n0x * n0x + n0y * n0y + n0z * n0z
    msq = mx * mx + my * my + mz * mz

    # cos = -dot_nm * rsqrt(|n0|^2 |n1|^2)  =>  1 - cos = 1 + dot_nm * rsqrt(...)
    contrib = 1.0 + dot_nm * lax.rsqrt(n0sq * msq)   # single EUP op per vreg

    tile_elems = tile_r * LANES
    base = (c * steps_per_core + i) * tile_elems     # first global edge id in this tile

    def vreg_sum(x):
        # Tree-add the tile_r/8 sublane groups into one (8,128) vreg (VPU adds only).
        return jnp.sum(x.reshape(tile_r // ACC_SUBLANES, ACC_SUBLANES, LANES), axis=0)

    @pl.when(base + tile_elems <= n_edges)           # full tile: no mask at all
    def _full():
        out_ref[...] += vreg_sum(contrib)

    @pl.when(base + tile_elems > n_edges)            # boundary / fully-padded tile
    def _partial():
        row = lax.broadcasted_iota(jnp.int32, (tile_r, LANES), 0)
        lane = lax.broadcasted_iota(jnp.int32, (tile_r, LANES), 1)
        valid = (base + row * LANES + lane) < n_edges
        # Padding lanes replicate edge 0's data, so the denominator is already
        # finite; only the contribution needs masking.
        out_ref[...] += vreg_sum(jnp.where(valid, contrib, 0.0))


def flatten_loss(vertices, v0s, v1s, v2s, v3s, *, tile_r=None, num_cores=2,
                 use_bf16=False):
    """vertices: (V, 3) f32. Returns scalar f32 loss = mean(1 - cos(dihedral))."""
    E = int(v0s.shape[0])
    R = _cdiv(E, LANES)                              # rows of 128 edges
    sub = 16 if use_bf16 else 8                      # bf16 packs 16 sublanes/vreg
    if tile_r is None:
        tile_r = min(512, _round_up(_cdiv(R, num_cores), sub))
    tile_r = max(sub, _round_up(int(tile_r), sub))
    steps = _cdiv(R, num_cores * tile_r)             # grid steps per core
    r_pad = num_cores * steps * tile_r
    e_pad = r_pad * LANES

    # Pad the *index* arrays (repeat edge 0) instead of padding gathered data.
    idx = np.stack([np.asarray(v0s, np.int32), np.asarray(v1s, np.int32),
                    np.asarray(v2s, np.int32), np.asarray(v3s, np.int32)], axis=0)
    if e_pad > E:
        idx = np.concatenate(
            [idx, np.broadcast_to(idx[:, :1], (4, e_pad - E))], axis=1)
    idx = jnp.asarray(idx.reshape(4, r_pad, LANES))

    # Gather + difference in XLA (fused), component-major layout:
    #   d[comp*3 + vec, r, l] = vertices[idx[vec+1, r, l], comp] - vertices[idx[0, r, l], comp]
    vt = jnp.asarray(vertices, jnp.float32).T        # (3, V)
    g = vt[:, idx]                                   # (3, 4, r_pad, LANES)
    d = (g[:, 1:] - g[:, :1]).reshape(9, r_pad, LANES)
    if use_bf16:
        d = d.astype(jnp.bfloat16)                   # after the f32 subtraction

    kernel = functools.partial(_flatten_loss_kernel, n_edges=E,
                               tile_r=tile_r, steps_per_core=steps)
    partial_sums = pl.pallas_call(
        kernel,
        out_shape=jax.ShapeDtypeStruct((num_cores * ACC_SUBLANES, LANES),
                                       jnp.float32),
        grid=(num_cores, steps),
        in_specs=[pl.BlockSpec((9, tile_r, LANES),
                               lambda c, i: (0, c * steps + i, 0))],
        out_specs=pl.BlockSpec((ACC_SUBLANES, LANES), lambda c, i: (c, 0)),
        compiler_params=pltpu.CompilerParams(
            dimension_semantics=("parallel", "arbitrary")),
    )(d)
    return jnp.sum(partial_sums) / float(E)


def _ref_loss(v, v0s, v1s, v2s, v3s, diff_dtype=jnp.float32):
    """Pure-JAX reference (same math as the PyTorch forward)."""
    a, b, c, d = v[v0s], v[v1s], v[v2s], v[v3s]
    c10 = (b - a).astype(diff_dtype).astype(jnp.float32)
    c20 = (c - a).astype(diff_dtype).astype(jnp.float32)
    c30 = (d - a).astype(diff_dtype).astype(jnp.float32)
    n0 = jnp.cross(c10, c20)
    n1 = -jnp.cross(c10, c30)
    cos = jnp.sum(n0 * n1, axis=1) / (
        jnp.linalg.norm(n0, axis=1) * jnp.linalg.norm(n1, axis=1))
    return jnp.mean(1.0 - cos)


if __name__ == "__main__":
    key = jax.random.PRNGKey(0)
    k1, k2 = jax.random.split(key)

    # --- Test 1: octahedron (12 edges -> tiny mesh, all-padded second core) --
    faces_oct = np.array([[0, 2, 4], [2, 1, 4], [1, 3, 4], [3, 0, 4],
                          [2, 0, 5], [1, 2, 5], [3, 1, 5], [0, 3, 5]], np.int32)
    e0 = build_edge_indices(faces_oct)
    base = jnp.array([[1, 0, 0], [-1, 0, 0], [0, 1, 0],
                      [0, -1, 0], [0, 0, 1], [0, 0, -1]], jnp.float32)
    verts_oct = base + 0.1 * jax.random.normal(k1, base.shape, jnp.float32)

    loss1 = flatten_loss(verts_oct, *e0)
    jax.block_until_ready(loss1)
    ref1 = _ref_loss(verts_oct, *e0)
    assert np.allclose(np.asarray(loss1), np.asarray(ref1),
                       rtol=1e-4, atol=1e-5), (loss1, ref1)

    # --- Test 2: 24x24 torus mesh (1728 edges) --------------------------------
    N = M = 24
    ii, jj = np.meshgrid(np.arange(N), np.arange(M), indexing="ij")
    theta = 2.0 * np.pi * ii / N
    phi = 2.0 * np.pi * jj / M
    Rmaj, rmin = 2.0, 0.8
    x = (Rmaj + rmin * np.cos(phi)) * np.cos(theta)
    y = (Rmaj + rmin * np.cos(phi)) * np.sin(theta)
    z = rmin * np.sin(phi)
    verts_np = np.stack([x, y, z], axis=-1).reshape(-1, 3).astype(np.float32)

    def vid(i, j):
        return (i % N) * M + (j % M)

    faces_list = []
    for i in range(N):
        for j in range(M):
            a, b, c, d = vid(i, j), vid(i + 1, j), vid(i + 1, j + 1), vid(i, j + 1)
            faces_list.append([a, b, c])
            faces_list.append([a, c, d])
    faces_tor = np.array(faces_list, np.int32)
    e1 = build_edge_indices(faces_tor)

    verts_tor = jnp.asarray(verts_np) + 0.01 * jax.random.normal(
        k2, verts_np.shape, jnp.float32)
    ref2 = _ref_loss(verts_tor, *e1)

    # 2a: default config — 2-core parallel split, full-tile fast path + mask tile.
    loss2a = flatten_loss(verts_tor, *e1)
    jax.block_until_ready(loss2a)
    assert np.allclose(np.asarray(loss2a), np.asarray(ref2),
                       rtol=1e-4, atol=1e-5), (loss2a, ref2)

    # 2b: single-core, small tile -> multi-step arbitrary axis with accumulation.
    loss2b = flatten_loss(verts_tor, *e1, tile_r=8, num_cores=1)
    jax.block_until_ready(loss2b)
    assert np.allclose(np.asarray(loss2b), np.asarray(ref2),
                       rtol=1e-4, atol=1e-5), (loss2b, ref2)

    # 2c: bf16 edge-difference channels (half the HBM traffic); compare against
    # a reference that applies the same bf16 rounding to the differences.
    loss2c = flatten_loss(verts_tor, *e1, use_bf16=True)
    jax.block_until_ready(loss2c)
    ref2c = _ref_loss(verts_tor, *e1, diff_dtype=jnp.bfloat16)
    assert np.allclose(np.asarray(loss2c), np.asarray(ref2c),
                       rtol=1e-4, atol=1e-5), (loss2c, ref2c)

    print("KERNEL_OK")
</pallas_src>

<mosaic_0001>
module attributes {stable_mosaic.version = 11 : i64} {
  func.func @_flatten_loss_kernel(%arg0: i32, %arg1: i32, %arg2: memref<9x8x128xf32, #tpu.memory_space<vmem>>, %arg3: memref<8x128xf32, #tpu.memory_space<vmem>>) attributes {dimension_semantics = [#tpu.dimension_semantics<parallel>, #tpu.dimension_semantics<arbitrary>], iteration_bounds = array<i64: 2, 1>, scalar_prefetch = 0 : i64, scratch_operands = 0 : i64, tpu.core_type = #tpu.core_type<tc>, window_params = [{transform_indices = @transform_0, window_bounds = array<i64: 9, 8, 128>}, {transform_indices = @transform_1, window_bounds = array<i64: 8, 128>}]} {
    %c0_i32 = arith.constant 0 : i32
    %0 = arith.cmpi eq, %arg1, %c0_i32 : i32
    %1 = arith.extui %0 : i1 to i32
    %c0_i32_0 = arith.constant 0 : i32
    %2 = arith.cmpi ne, %1, %c0_i32_0 : i32
    scf.if %2 {
      %cst_24 = arith.constant 0.000000e+00 : f32
      %70 = vector.broadcast %cst_24 : f32 to vector<8x128xf32>
      %c0_25 = arith.constant 0 : index
      %c0_26 = arith.constant 0 : index
      %71 = vector.load %arg3[%c0_25, %c0_26] : memref<8x128xf32, #tpu.memory_space<vmem>>, vector<8x128xf32>
      tpu.vector_store %arg3[%c0_25, %c0_26], %70 {strides = array<i32>} : memref<8x128xf32, #tpu.memory_space<vmem>>, vector<8x128xf32>,
    } else {
    }
    %c0 = arith.constant 0 : index
    %c0_1 = arith.constant 0 : index
    %c0_2 = arith.constant 0 : index
    %3 = vector.load %arg2[%c0, %c0_1, %c0_2] : memref<9x8x128xf32, #tpu.memory_space<vmem>>, vector<1x8x128xf32>
    %4 = vector.shape_cast %3 : vector<1x8x128xf32> to vector<8x128xf32>
    %c1 = arith.constant 1 : index
    %c0_3 = arith.constant 0 : index
    %c0_4 = arith.constant 0 : index
    %5 = vector.load %arg2[%c1, %c0_3, %c0_4] : memref<9x8x128xf32, #tpu.memory_space<vmem>>, vector<1x8x128xf32>
    %6 = vector.shape_cast %5 : vector<1x8x128xf32> to vector<8x128xf32>
    %c2 = arith.constant 2 : index
    %c0_5 = arith.constant 0 : index
    %c0_6 = arith.constant 0 : index
    %7 = vector.load %arg2[%c2, %c0_5, %c0_6] : memref<9x8x128xf32, #tpu.memory_space<vmem>>, vector<1x8x128xf32>
    %8 = vector.shape_cast %7 : vector<1x8x128xf32> to vector<8x128xf32>
    %c3 = arith.constant 3 : index
    %c0_7 = arith.constant 0 : index
    %c0_8 = arith.constant 0 : index
    %9 = vector.load %arg2[%c3, %c0_7, %c0_8] : memref<9x8x128xf32, #tpu.memory_space<vmem>>, vector<1x8x128xf32>
    %10 = vector.shape_cast %9 : vector<1x8x128xf32> to vector<8x128xf32>
    %c4 = arith.constant 4 : index
    %c0_9 = arith.constant 0 : index
    %c0_10 = arith.constant 0 : index
    %11 = vector.load %arg2[%c4, %c0_9, %c0_10] : memref<9x8x128xf32, #tpu.memory_space<vmem>>, vector<1x8x128xf32>
    %12 = vector.shape_cast %11 : vector<1x8x128xf32> to vector<8x128xf32>
    %c5 = arith.constant 5 : index
    %c0_11 = arith.constant 0 : index
    %c0_12 = arith.constant 0 : index
    %13 = vector.load %arg2[%c5, %c0_11, %c0_12] : memref<9x8x128xf32, #tpu.memory_space<vmem>>, vector<1x8x128xf32>
    %14 = vector.shape_cast %13 : vector<1x8x128xf32> to vector<8x128xf32>
    %c6 = arith.constant 6 : index
    %c0_13 = arith.constant 0 : index
    %c0_14 = arith.constant 0 : index
    %15 = vector.load %arg2[%c6, %c0_13, %c0_14] : memref<9x8x128xf32, #tpu.memory_space<vmem>>, vector<1x8x128xf32>
    %16 = vector.shape_cast %15 : vector<1x8x128xf32> to vector<8x128xf32>
    %c7 = arith.constant 7 : index
    %c0_15 = arith.constant 0 : index
    %c0_16 = arith.constant 0 : index
    %17 = vector.load %arg2[%c7, %c0_15, %c0_16] : memref<9x8x128xf32, #tpu.memory_space<vmem>>, vector<1x8x128xf32>
    %18 = vector.shape_cast %17 : vector<1x8x128xf32> to vector<8x128xf32>
    %c8 = arith.constant 8 : index
    %c0_17 = arith.constant 0 : index
    %c0_18 = arith.constant 0 : index
    %19 = vector.load %arg2[%c8, %c0_17, %c0_18] : memref<9x8x128xf32, #tpu.memory_space<vmem>>, vector<1x8x128xf32>
    %20 = vector.shape_cast %19 : vector<1x8x128xf32> to vector<8x128xf32>
    %21 = arith.mulf %10, %18 : vector<8x128xf32>
    %22 = arith.mulf %16, %12 : vector<8x128xf32>
    %23 = arith.subf %21, %22 : vector<8x128xf32>
    %24 = arith.mulf %16, %6 : vector<8x128xf32>
    %25 = arith.mulf %4, %18 : vector<8x128xf32>
    %26 = arith.subf %24, %25 : vector<8x128xf32>
    %27 = arith.mulf %4, %12 : vector<8x128xf32>
    %28 = arith.mulf %10, %6 : vector<8x128xf32>
    %29 = arith.subf %27, %28 : vector<8x128xf32>
    %30 = arith.mulf %10, %20 : vector<8x128xf32>
    %31 = arith.mulf %16, %14 : vector<8x128xf32>
    %32 = arith.subf %30, %31 : vector<8x128xf32>
    %33 = arith.mulf %16, %8 : vector<8x128xf32>
    %34 = arith.mulf %4, %20 : vector<8x128xf32>
    %35 = arith.subf %33, %34 : vector<8x128xf32>
    %36 = arith.mulf %4, %14 : vector<8x128xf32>
    %37 = arith.mulf %10, %8 : vector<8x128xf32>
    %38 = arith.subf %36, %37 : vector<8x128xf32>
    %39 = arith.mulf %23, %32 : vector<8x128xf32>
    %40 = arith.mulf %26, %35 : vector<8x128xf32>
    %41 = arith.addf %39, %40 : vector<8x128xf32>
    %42 = arith.mulf %29, %38 : vector<8x128xf32>
    %43 = arith.addf %41, %42 : vector<8x128xf32>
    %44 = arith.mulf %23, %23 : vector<8x128xf32>
    %45 = arith.mulf %26, %26 : vector<8x128xf32>
    %46 = arith.addf %44, %45 : vector<8x128xf32>
    %47 = arith.mulf %29, %29 : vector<8x128xf32>
    %48 = arith.addf %46, %47 : vector<8x128xf32>
    %49 = arith.mulf %32, %32 : vector<8x128xf32>
    %50 = arith.mulf %35, %35 : vector<8x128xf32>
    %51 = arith.addf %49, %50 : vector<8x128xf32>
    %52 = arith.mulf %38, %38 : vector<8x128xf32>
    %53 = arith.addf %51, %52 : vector<8x128xf32>
    %54 = arith.mulf %48, %53 : vector<8x128xf32>
    %55 = math.rsqrt %54 : vector<8x128xf32>
    %56 = arith.mulf %43, %55 : vector<8x128xf32>
    %cst = arith.constant 1.000000e+00 : f32
    %57 = vector.broadcast %cst : f32 to vector<8x128xf32>
    %58 = arith.addf %57, %56 : vector<8x128xf32>
    %c1_i32 = arith.constant 1 : i32
    %59 = arith.muli %arg0, %c1_i32 : i32
    %60 = arith.addi %59, %arg1 : i32
    %c1024_i32 = arith.constant 1024 : i32
    %61 = arith.muli %60, %c1024_i32 : i32
    %c1024_i32_19 = arith.constant 1024 : i32
    %62 = arith.addi %61, %c1024_i32_19 : i32
    %c12_i32 = arith.constant 12 : i32
    %63 = arith.cmpi sle, %62, %c12_i32 : i32
    %64 = arith.extui %63 : i1 to i32
    %c0_i32_20 = arith.constant 0 : i32
    %65 = arith.cmpi ne, %64, %c0_i32_20 : i32
    scf.if %65 {
      %c0_24 = arith.constant 0 : index
      %c0_25 = arith.constant 0 : index
      %70 = vector.load %arg3[%c0_24, %c0_25] : memref<8x128xf32, #tpu.memory_space<vmem>>, vector<8x128xf32>
      %71 = vector.shape_cast %58 : vector<8x128xf32> to vector<1x8x128xf32>
      %cst_26 = arith.constant dense<0.000000e+00> : vector<8x128xf32>
      %72 = vector.multi_reduction <add>, %71, %cst_26 [0] : vector<1x8x128xf32> to vector<8x128xf32>
      %73 = arith.addf %70, %72 : vector<8x128xf32>
      %c0_27 = arith.constant 0 : index
      %c0_28 = arith.constant 0 : index
      %74 = vector.load %arg3[%c0_27, %c0_28] : memref<8x128xf32, #tpu.memory_space<vmem>>, vector<8x128xf32>
      tpu.vector_store %arg3[%c0_27, %c0_28], %73 {strides = array<i32>} : memref<8x128xf32, #tpu.memory_space<vmem>>, vector<8x128xf32>,
    } else {
    }
    %c1024_i32_21 = arith.constant 1024 : i32
    %66 = arith.addi %61, %c1024_i32_21 : i32
    %c12_i32_22 = arith.constant 12 : i32
    %67 = arith.cmpi sgt, %66, %c12_i32_22 : i32
    %68 = arith.extui %67 : i1 to i32
    %c0_i32_23 = arith.constant 0 : i32
    %69 = arith.cmpi ne, %68, %c0_i32_23 : i32
    scf.if %69 {
      %70 = tpu.iota {dimensions = array<i32: 0>} : vector<8x128xi32>
      %71 = tpu.iota {dimensions = array<i32: 1>} : vector<8x128xi32>
      %c128_i32 = arith.constant 128 : i32
      %72 = vector.broadcast %c128_i32 : i32 to vector<8x128xi32>
      %73 = arith.muli %70, %72 : vector<8x128xi32>
      %74 = vector.broadcast %61 : i32 to vector<8x128xi32>
      %75 = arith.addi %74, %73 : vector<8x128xi32>
      %76 = arith.addi %75, %71 : vector<8x128xi32>
      %c12_i32_24 = arith.constant 12 : i32
      %77 = vector.broadcast %c12_i32_24 : i32 to vector<8x128xi32>
      %78 = arith.cmpi slt, %76, %77 : vector<8x128xi32>
      %c0_25 = arith.constant 0 : index
      %c0_26 = arith.constant 0 : index
      %79 = vector.load %arg3[%c0_25, %c0_26] : memref<8x128xf32, #tpu.memory_space<vmem>>, vector<8x128xf32>
      %cst_27 = arith.constant 0.000000e+00 : f32
      %80 = vector.broadcast %cst_27 : f32 to vector<8x128xf32>
      %81 = arith.select %78, %58, %80 : vector<8x128xi1>, vector<8x128xf32>
      %82 = vector.shape_cast %81 : vector<8x128xf32> to vector<1x8x128xf32>
      %cst_28 = arith.constant dense<0.000000e+00> : vector<8x128xf32>
      %83 = vector.multi_reduction <add>, %82, %cst_28 [0] : vector<1x8x128xf32> to vector<8x128xf32>
      %84 = arith.addf %79, %83 : vector<8x128xf32>
      %c0_29 = arith.constant 0 : index
      %c0_30 = arith.constant 0 : index
      %85 = vector.load %arg3[%c0_29, %c0_30] : memref<8x128xf32, #tpu.memory_space<vmem>>, vector<8x128xf32>
      tpu.vector_store %arg3[%c0_29, %c0_30], %84 {strides = array<i32>} : memref<8x128xf32, #tpu.memory_space<vmem>>, vector<8x128xf32>,
    } else {
    }
    return
  }
  func.func @transform_0(%arg0: i32, %arg1: i32) -> (i32, i32, i32) {
    %c1_i32 = arith.constant 1 : i32
    %0 = arith.muli %arg0, %c1_i32 : i32
    %1 = arith.addi %0, %arg1 : i32
    %c0_i32 = arith.constant 0 : i32
    %c0_i32_0 = arith.constant 0 : i32
    %c0_i32_1 = arith.constant 0 : i32
    return %c0_i32, %1, %c0_i32_0 : i32, i32, i32
  }
  func.func @transform_1(%arg0: i32, %arg1: i32) -> (i32, i32) {
    %c0_i32 = arith.constant 0 : i32
    %c0_i32_0 = arith.constant 0 : i32
    return %arg0, %c0_i32 : i32, i32
  }
}

</mosaic_0001>

<llo_original>
// kernel: tpu_custom_call.1
$region0: #{tpu_custom_call.1}
  #allocation0 [shape = 'u32[]', space=smem, size = 0x4, offset = 0x4, fixed_abs, tag = 'smem constant byte address 0x4 - core index']
  #allocation1 [shape = 'u32[144,128]{1,0:T(1,128)}', space=vmem, size = 0x12000, scoped, tag = 'internal scratch']
  %s0 = inlined_call_operand.hbm [shape: f32[9,16,128], index: 0, kind: input, shape index: {}]
  %s1 = inlined_call_operand.hbm [shape: f32[16,128], index: 1, kind: output, shape index: {}]
  %s2 = sld [smem:[#allocation0]]
  $region53: #{tpu_custom_call.1} parent=0
    _
  %s4 = ssub.s32 1, %s2
  %s5 = scalar_select 0, %s4, %s2
  $region1: #{tpu_custom_call.1} parent=0
    #allocation2 [shape = 'u8[73728]{0}', space=vmem, size = 0x12000, scoped, tag = 'input window, operand 0']
    #allocation3 [shape = 's32[2]{0}', space=sflag, size = 0x8, scoped, tag = 'scoped memory for tpu_custom_call.1']
    #allocation4 [shape = 's32[2]{0}', space=sflag, size = 0x8, scoped, tag = 'scoped memory for tpu_custom_call.1']
    #allocation5 [shape = 'u8[8192]{0}', space=vmem, size = 0x2000, scoped, tag = 'output window, operand 0']
    %6 = vsyncpa [#allocation3], 0
    %s7 = scalar_lea.sflag [#allocation3], 1
    %8 = vsyncpa %s7, 0
    %9 = vsyncpa [#allocation4], 0
    %s10 = scalar_lea.sflag [#allocation4], 1
    %11 = vsyncpa %s10, 0
    loop: start=0, step=1, limit=4
    $region2: #{tpu_custom_call.1} parent=1 // loop_pre_header
      _
    $region3: #{tpu_custom_call.1} parent=1 // loop_header
      %s13 = sphi 0, %s17
      %p14 = scmp.ge.s32.totalorder %s13, 4
      %s20 = sphi 0, %s32
      %s21 = sphi 0, %s28
      %s22 = sphi 0, %s20
      %s23 = sphi 0, %s21
      %s24 = sphi 0, %s22
      %s25 = sphi 0, %s23
      %s37 = sphi 0, %s39
      %s40 = sphi 0, %s37
      %s41 = sphi 0, %s40
      %s57 = sphi 0, %s41
      %s63 = sphi 0, %s65
      %s66 = sphi 0, %s63
      %s67 = sphi 0, %s66
      %s83 = sphi 0, %s67
    $region4: #{tpu_custom_call.1} parent=1 // loop_header_branch
      %16 = sbr.rel (%p14) target = $region8
    $region5: #{tpu_custom_call.1} parent=1 // loop_body
      %s18 = ssub.s32 %s13, 1
      %s19 = ssub.s32 %s13, 2
      %s26 = sadd.s32 1, %s21
      %p27 = scmp.ge.s32.totalorder %s26, 1
      %s28 = scalar_select %p27, 0, %s26
      %s29 = sadd.s32 1, %s20
      %s30 = scalar_select %p27, %s29, %s20
      %p31 = scmp.ge.s32.totalorder %s30, 2
      %s32 = scalar_select %p31, 0, %s30
      %s33 = sadd.s32 %s20, %s21
      %s34 = sadd.s32 %s32, %s28
      %s35 = ssub.s32 %s33, %s34
      %p36 = scmp.eq.s32.totalorder %s35, 0
      %s38 = sadd.s32 %s37, 1
      %s39 = scalar_select %p36, %s37, %s38
      %p42 = pneg %p36
      %p43 = scmp.eq.s32.totalorder %s13, 1
      %p44 = por %p42, %p43
      %p45 = scmp.ne.s32.totalorder %s37, %s40
      %p46 = scmp.eq.s32.totalorder %s13, 0
      %p47 = por %p45, %p46
      %p48 = scmp.ne.s32.totalorder %s37, %s40
      %p49 = scmp.eq.s32.totalorder %s18, 1
      %p50 = por %p48, %p49
      %p51 = scmp.ne.s32.totalorder %s40, %s41
      %p52 = scmp.eq.s32.totalorder %s18, 0
      %p53 = por %p51, %p52
      %p54 = scmp.ne.s32.totalorder %s40, %s41
      %p55 = scmp.eq.s32.totalorder %s19, 1
      %p56 = por %p54, %p55
      %p58 = scmp.ne.s32.totalorder %s41, %s57
      %p59 = scmp.eq.s32.totalorder %s19, 0
      %p60 = por %p58, %p59
      %s61 = ssub.s32 %s20, %s32
      %p62 = scmp.eq.s32.totalorder %s61, 0
      %s64 = sadd.s32 %s63, 1
      %s65 = scalar_select %p62, %s63, %s64
      %p68 = pneg %p62
      %p69 = scmp.eq.s32.totalorder %s13, 1
      %p70 = por %p68, %p69
      %p71 = scmp.ne.s32.totalorder %s63, %s66
      %p72 = scmp.eq.s32.totalorder %s13, 0
      %p73 = por %p71, %p72
      %p74 = scmp.ne.s32.totalorder %s63, %s66
      %p75 = scmp.eq.s32.totalorder %s18, 1
      %p76 = por %p74, %p75
      %p77 = scmp.ne.s32.totalorder %s66, %s67
      %p78 = scmp.eq.s32.totalorder %s18, 0
      %p79 = por %p77, %p78
      %p80 = scmp.ne.s32.totalorder %s66, %s67
      %p81 = scmp.eq.s32.totalorder %s19, 1
      %p82 = por %p80, %p81
      %p84 = scmp.ne.s32.totalorder %s67, %s83
      %p85 = scmp.eq.s32.totalorder %s19, 0
      %p86 = por %p84, %p85
      %p87 = scmp.le.s32.totalorder 1, %s13
      %p88 = scmp.lt.s32.totalorder %s13, 3
      %p89 = pnand %p87, %p88
      %p90 = pneg %p89
      // Predicated region
      $region9: #{tpu_custom_call.1} parent=5 // pred_check
        _
      $region10: #{tpu_custom_call.1} parent=5 // pred_check_branch
        %92 = sbr.rel (%p89) target = $region12
      $region11: #{tpu_custom_call.1} parent=5 // pred_region
        %s93 = ssub.s32 %s13, 1
      $region12: #{tpu_custom_call.1} parent=5 // pred_fallthru
        _
      %p94 = scmp.lt.s32.totalorder %s13, 2
      // Predicated region
      $region13: #{tpu_custom_call.1} parent=5 // pred_check
        %p95 = pneg %p94
      $region14: #{tpu_custom_call.1} parent=5 // pred_check_branch
        %97 = sbr.rel (%p95) target = $region16
      $region15: #{tpu_custom_call.1} parent=5 // pred_region
        // Predicated region
        $region17: #{tpu_custom_call.1} parent=15 // pred_check
          %p98 = pneg %p47
        $region18: #{tpu_custom_call.1} parent=15 // pred_check_branch
          %100 = sbr.rel (%p98) target = $region20
        $region19: #{tpu_custom_call.1} parent=15 // pred_region
          %s101 = sand.u32 %s37, 1
          %s102 = scalar_lea.sflag [#allocation3], %s101
          %s103 = sand.u32 %s37, 1
          %s104 = smul.addr %s103, 72
          %s105 = scalar_lea.vmem [#allocation2], %s104
          %s106 = sadd.s32 %s20, %s21
          %s108 = ssub.s32 1152, 1152
          %109 = vsyncadd %s102, %s108
          %s110 = smul.addr %s106, 128
          %s111 = scalar_lea.hbm %s0, %s110
          %s112 = sshll.u32 %s105, 4
          %s113 = int_to_ptr.vmem [resolvable:$true] %s112
          %118 = dma.hbm_to_vmem [thread:$0]  %s111, 1152, %s113, %s102, 256, 128, 8
        $region20: #{tpu_custom_call.1} parent=15 // pred_fallthru
          _
      $region16: #{tpu_custom_call.1} parent=5 // pred_fallthru
        _
      %p119 = scmp.le.s32.totalorder 1, %s13
      %p120 = scmp.lt.s32.totalorder %s13, 3
      %p121 = pnand %p119, %p120
      %p122 = pneg %p121
      // Predicated region
      $region21: #{tpu_custom_call.1} parent=5 // pred_check
        _
      $region22: #{tpu_custom_call.1} parent=5 // pred_check_branch
        %124 = sbr.rel (%p121) target = $region24
      $region23: #{tpu_custom_call.1} parent=5 // pred_region
        %s125 = ssub.s32 %s13, 1
        %s126 = sand.u32 %s40, 1
        %s127 = scalar_lea.sflag [#allocation3], %s126
        %s128 = sand.u32 %s40, 1
        %s129 = smul.addr %s128, 72
        %s130 = scalar_lea.vmem [#allocation2], %s129
        // Predicated region
        $region25: #{tpu_custom_call.1} parent=23 // pred_check
          %p131 = pneg %p53
        $region26: #{tpu_custom_call.1} parent=23 // pred_check_branch
          %133 = sbr.rel (%p131) target = $region28
        $region27: #{tpu_custom_call.1} parent=23 // pred_region
          %134 = dma.done %s127, 1152
        $region28: #{tpu_custom_call.1} parent=23 // pred_fallthru
          _
        %s135 = sand.u32 %s40, 1
        %s136 = scalar_lea.sflag [#allocation3], %s135
        %s137 = sand.u32 %s40, 1
        %s138 = smul.addr %s137, 72
        %s139 = scalar_lea.vmem [#allocation2], %s138
        %p140 = pneg %p53
        %p141 = pneg %p50
        %p142 = pneg %p79
        %p143 = pneg %p76
        %s144 = sand.u32 %s66, 1
        %s145 = scalar_lea.sflag [#allocation4], %s144
        %s146 = sand.u32 %s66, 1
        %s147 = smul.addr %s146, 8
        %s148 = scalar_lea.vmem [#allocation5], %s147
        %s149 = sadd.s32 %s22, %s23
        %p150 = scmp.eq.s32.totalorder %s23, 0
        // Predicated region
        $region29: #{tpu_custom_call.1} parent=23 // pred_check
          %p151 = pneg %p150
        $region30: #{tpu_custom_call.1} parent=23 // pred_check_branch
          %153 = sbr.rel (%p151) target = $region32
        $region31: #{tpu_custom_call.1} parent=23 // pred_region
          %154 = vst [vmem:[%s148] sm:$0xff] 0.0
        $region32: #{tpu_custom_call.1} parent=23 // pred_fallthru
          _
        %v155 = vld [vmem:[%s130] sm:$0xff]
        %s156 = scalar_lea.vmem %s130, 8 [#allocation2]
        %v157 = vld [vmem:[%s156] sm:$0xff]
        %s158 = scalar_lea.vmem %s130, 16 [#allocation2]
        %v159 = vld [vmem:[%s158] sm:$0xff]
        %s160 = scalar_lea.vmem %s130, 24 [#allocation2]
        %v161 = vld [vmem:[%s160] sm:$0xff]
        %s162 = scalar_lea.vmem %s130, 32 [#allocation2]
        %v163 = vld [vmem:[%s162] sm:$0xff]
        %s164 = scalar_lea.vmem %s130, 40 [#allocation2]
        %v165 = vld [vmem:[%s164] sm:$0xff]
        %s166 = scalar_lea.vmem %s130, 48 [#allocation2]
        %v167 = vld [vmem:[%s166] sm:$0xff]
        %s168 = scalar_lea.vmem %s130, 56 [#allocation2]
        %v169 = vld [vmem:[%s168] sm:$0xff]
        %s170 = scalar_lea.vmem %s130, 64 [#allocation2]
        %v171 = vld [vmem:[%s170] sm:$0xff]
        %v172 = vmul.f32 %v161, %v169
        %v173 = vmul.f32 %v167, %v163
        %v174 = vsub.f32 %v172, %v173
        %v175 = vmul.f32 %v167, %v157
        %v176 = vmul.f32 %v155, %v169
        %v177 = vsub.f32 %v175, %v176
        %v178 = vmul.f32 %v155, %v163
        %v179 = vmul.f32 %v161, %v157
        %v180 = vsub.f32 %v178, %v179
        %v181 = vmul.f32 %v161, %v171
        %v182 = vmul.f32 %v167, %v165
        %v183 = vsub.f32 %v181, %v182
        %v184 = vmul.f32 %v167, %v159
        %v185 = vmul.f32 %v155, %v171
        %v186 = vsub.f32 %v184, %v185
        %v187 = vmul.f32 %v155, %v165
        %v188 = vmul.f32 %v161, %v159
        %v189 = vsub.f32 %v187, %v188
        %v190 = vmul.f32 %v174, %v183
        %v191 = vmul.f32 %v177, %v186
        %v192 = vadd.f32 %v190, %v191
        %v193 = vmul.f32 %v180, %v189
        %v194 = vadd.f32 %v192, %v193
        %v195 = vmul.f32 %v174, %v174
        %v196 = vmul.f32 %v177, %v177
        %v197 = vadd.f32 %v195, %v196
        %v198 = vmul.f32 %v180, %v180
        %v199 = vadd.f32 %v197, %v198
        %v200 = vmul.f32 %v183, %v183
        %v201 = vmul.f32 %v186, %v186
        %v202 = vadd.f32 %v200, %v201
        %v203 = vmul.f32 %v189, %v189
        %v204 = vadd.f32 %v202, %v203
        %v205 = vmul.f32 %v199, %v204
        %v206 = vrsqrt.pop %v205
        %v207 = vmul.f32 %v194, %v206
        %v208 = vadd.f32 %v207, 1.0
        %s209 = sadd.s32 %s22, %s23
        %s210 = smul.u32 %s209, 1024
        %s211 = sadd.s32 %s210, 1024
        %p212 = scmp.le.s32.totalorder %s211, 12
        // Predicated region
        $region33: #{tpu_custom_call.1} parent=23 // pred_check
          %p213 = pneg %p212
        $region34: #{tpu_custom_call.1} parent=23 // pred_check_branch
          %215 = sbr.rel (%p213) target = $region36
        $region35: #{tpu_custom_call.1} parent=23 // pred_region
          %v216 = vld [vmem:[%s148] sm:$0xff]
          %v217 = vadd.f32 %v208, 0.0
          %v218 = vadd.f32 %v216, %v217
          %219 = vst [vmem:[%s148] sm:$0xff] %v218
        $region36: #{tpu_custom_call.1} parent=23 // pred_fallthru
          _
        %p220 = scmp.gt.s32.totalorder %s211, 12
        // Predicated region
        $region37: #{tpu_custom_call.1} parent=23 // pred_check
          %p221 = pneg %p220
        $region38: #{tpu_custom_call.1} parent=23 // pred_check_branch
          %223 = sbr.rel (%p221) target = $region40
        $region39: #{tpu_custom_call.1} parent=23 // pred_region
          %v224 = vlaneseq
          %v225 = vshrl.u32 %v224, 7
          %v226 = vlaneseq
          %v227 = vand.u32 %v226, 127
          %v228 = vmul.u32 %v225, 128
          %v229 = vstv %s210
          %v230 = vadd.s32 %v229, %v228
          %v231 = vadd.s32 %v230, %v227
          %vm232 = vcmp.lt.s32.totalorder %v231, 12
          %v233 = vld [vmem:[%s148] sm:$0xff]
          %v234 = vsel %vm232, %v208, 0.0
          %v235 = vadd.f32 %v234, 0.0
          %v236 = vadd.f32 %v233, %v235
          %237 = vst [vmem:[%s148] sm:$0xff] %v236
        $region40: #{tpu_custom_call.1} parent=23 // pred_fallthru
          _
        %s238 = sand.u32 %s66, 1
        %s239 = scalar_lea.sflag [#allocation4], %s238
        %s240 = sand.u32 %s66, 1
        %s241 = smul.addr %s240, 8
        %s242 = scalar_lea.vmem [#allocation5], %s241
        // Predicated region
        $region41: #{tpu_custom_call.1} parent=23 // pred_check
          %p243 = pneg %p76
        $region42: #{tpu_custom_call.1} parent=23 // pred_check_branch
          %245 = sbr.rel (%p243) target = $region44
        $region43: #{tpu_custom_call.1} parent=23 // pred_region
          %s247 = ssub.s32 128, 128
          %248 = vsyncadd %s239, %s247
          %s249 = smul.addr %s22, 128
          %s250 = scalar_lea.hbm %s1, %s249
          %s252 = sshll.u32 %s242, 4
          %s253 = int_to_ptr.vmem [resolvable:$true] %s252
          %255 = dma.vmem_to_hbm [thread:$0]  %s253, 128, %s250, %s239
        $region44: #{tpu_custom_call.1} parent=23 // pred_fallthru
          _
      $region24: #{tpu_custom_call.1} parent=5 // pred_fallthru
        _
      %p256 = scmp.le.s32.totalorder 2, %s13
      // Predicated region
      $region45: #{tpu_custom_call.1} parent=5 // pred_check
        %p257 = pneg %p256
      $region46: #{tpu_custom_call.1} parent=5 // pred_check_branch
        %259 = sbr.rel (%p257) target = $region48
      $region47: #{tpu_custom_call.1} parent=5 // pred_region
        %s260 = ssub.s32 %s13, 2
        // Predicated region
        $region49: #{tpu_custom_call.1} parent=47 // pred_check
          %p261 = pneg %p82
        $region50: #{tpu_custom_call.1} parent=47 // pred_check_branch
          %263 = sbr.rel (%p261) target = $region52
        $region51: #{tpu_custom_call.1} parent=47 // pred_region
          %s264 = sand.u32 %s67, 1
          %s265 = scalar_lea.sflag [#allocation4], %s264
          %s266 = sand.u32 %s67, 1
          %s267 = smul.addr %s266, 8
          %s268 = scalar_lea.vmem [#allocation5], %s267
          %269 = dma.done %s265, 128
        $region52: #{tpu_custom_call.1} parent=47 // pred_fallthru
          _
      $region48: #{tpu_custom_call.1} parent=5 // pred_fallthru
        _
    $region6: #{tpu_custom_call.1} parent=1 // loop_footer
      %s17 = sadd.s32 1, %s13
    $region7: #{tpu_custom_call.1} parent=1 // loop_footer_branch
      %12 = sbr.rel target = $region3
    $region8: #{tpu_custom_call.1} parent=1 // loop_exit
      _
    %270 = vsyncpa [#allocation3], 1
    %s271 = scalar_lea.sflag [#allocation3], 1
    %272 = vsyncpa %s271, 1
    %273 = vsyncpa [#allocation4], 1
    %s274 = scalar_lea.sflag [#allocation4], 1
    %275 = vsyncpa %s274, 1

</llo_original>
